<compile_context>
chip_gen: v7x
topology: tpu7x:2x2x1
jax: 0.10.0
libtpu: 0.0.40
codegen_flags: <defaults>
</compile_context>

<pallas_src>
import functools

import jax
import jax.numpy as jnp
from jax.experimental import pallas as pl
from jax.experimental.pallas import tpu as pltpu

_HIDDEN = 128


# ----------------------------------------------------------------------------
# Pallas kernel
# ----------------------------------------------------------------------------
def _bdq_kernel(dof, x_ref, w1_ref, wmid_ref, wout_ref, bias_ref, out_ref):
    """One fused forward pass.

    dof       : n_devices * num_outputs (static)
    x_ref     : (bm, num_inputs)
    w1_ref    : (num_inputs, 128)
    wmid_ref  : (128, 384)  = [ w2 | wa1 | wv1 ]
    wout_ref  : (256, dof)  = [ wa2 @ C ; repeat(wv2) ]   (dueling combine folded in)
    bias_ref  : (4, >=256)  rows: b1 | b2 | [ba1|bv1] | b_c
    out_ref   : (bm, dof)
    """
    H = _HIDDEN
    x = x_ref[...]

    b1 = bias_ref[0:1, :H]
    b2 = bias_ref[1:2, :H]
    bh = bias_ref[2:3, :2 * H]
    bc = bias_ref[3:4, :dof]

    # feature trunk: Linear -> ReLU -> Linear -> ReLU
    h = jnp.maximum(
        jnp.dot(x, w1_ref[...], preferred_element_type=jnp.float32) + b1, 0.0)
    h = jnp.maximum(
        jnp.dot(h, wmid_ref[:, :H], preferred_element_type=jnp.float32) + b2, 0.0)

    # fused advantage/value hidden layer: one (128, 256) matmul, static lane slice
    av = jnp.maximum(
        jnp.dot(h, wmid_ref[:, H:], preferred_element_type=jnp.float32) + bh, 0.0)

    # fused head output + dueling combine (mean-subtraction / value broadcast are
    # already folded into wout / bc): single lane-dense store.
    out_ref[...] = (
        jnp.dot(av, wout_ref[...], preferred_element_type=jnp.float32) + bc)


# ----------------------------------------------------------------------------
# Parameter folding (done once, outside the kernel)
# ----------------------------------------------------------------------------
def fold_bdq_params(p, *, n_devices, num_outputs):
    """Pack raw (torch-layout) params into the fused/folded kernel layout."""
    H = _HIDDEN
    D, O = n_devices, num_outputs
    DO = D * O

    # Per-branch centering matrix:  C = I - block_diag(ones(O,O)/O)
    C = jnp.eye(DO, dtype=jnp.float32) - jnp.kron(
        jnp.eye(D, dtype=jnp.float32),
        jnp.full((O, O), 1.0 / O, dtype=jnp.float32))

    wa2_c = p["wa2"] @ C                                   # (H, DO)
    ba2_c = p["ba2"] @ C                                   # (1, DO)
    wv2_rep = jnp.repeat(p["wv2"], O, axis=1)              # (H, DO)  value broadcast
    bv2_rep = jnp.repeat(p["bv2"], O, axis=1)              # (1, DO)

    w_mid = jnp.concatenate([p["w2"], p["wa1"], p["wv1"]], axis=1)   # (H, 3H)
    w_out = jnp.concatenate([wa2_c, wv2_rep], axis=0)                # (2H, DO)
    b_c = ba2_c + bv2_rep                                            # (1, DO)

    bias_w = max(2 * H, DO)
    bias = jnp.zeros((4, bias_w), jnp.float32)
    bias = bias.at[0, :H].set(p["b1"][0])
    bias = bias.at[1, :H].set(p["b2"][0])
    bias = bias.at[2, :H].set(p["ba1"][0])
    bias = bias.at[2, H:2 * H].set(p["bv1"][0])
    bias = bias.at[3, :DO].set(b_c[0])

    return {"w1": p["w1"], "w_mid": w_mid, "w_out": w_out, "bias": bias}


# ----------------------------------------------------------------------------
# Wrapper
# ----------------------------------------------------------------------------
def bdq_forward(x, folded, *, n_devices, num_outputs, block_b=256):
    if x.ndim == 1:                 # mimic the torch module's unsqueeze(0)
        x = x[None, :]
    B, num_inputs = x.shape
    H = _HIDDEN
    DO = n_devices * num_outputs

    w1, w_mid, w_out, bias = (folded["w1"], folded["w_mid"],
                              folded["w_out"], folded["bias"])

    bm = B if B <= block_b else block_b
    grid = (pl.cdiv(B, bm),)

    out2d = pl.pallas_call(
        functools.partial(_bdq_kernel, DO),
        out_shape=jax.ShapeDtypeStruct((B, DO), jnp.float32),
        grid=grid,
        in_specs=[
            pl.BlockSpec((bm, num_inputs), lambda i: (i, 0)),
            pl.BlockSpec(w1.shape, lambda i: (0, 0)),     # weights pinned resident
            pl.BlockSpec(w_mid.shape, lambda i: (0, 0)),
            pl.BlockSpec(w_out.shape, lambda i: (0, 0)),
            pl.BlockSpec(bias.shape, lambda i: (0, 0)),
        ],
        out_specs=pl.BlockSpec((bm, DO), lambda i: (i, 0)),
        compiler_params=pltpu.CompilerParams(
            dimension_semantics=("parallel",)),
    )(x, w1, w_mid, w_out, bias)

    # Row-major reshape -> free metadata op in the wrapper.
    return out2d.reshape(B, n_devices, num_outputs)


# ----------------------------------------------------------------------------
# Deterministic parameter init (orthogonal with gain=2, zero bias — matches
# nn.init.orthogonal_ / zeros_ in the PyTorch module)
# ----------------------------------------------------------------------------
def _orthogonal(key, fan_in, fan_out, gain):
    n_big, n_small = max(fan_in, fan_out), min(fan_in, fan_out)
    a = jax.random.normal(key, (n_big, n_small), dtype=jnp.float32)
    q, r = jnp.linalg.qr(a)
    q = q * jnp.sign(jnp.diagonal(r))[None, :]
    if fan_in < fan_out:
        q = q.T
    return (gain * q[:fan_in, :fan_out]).astype(jnp.float32)


def init_bdq_params(key, num_inputs, num_outputs, n_devices, gain=2.0):
    ks = jax.random.split(key, 6)
    H = _HIDDEN
    p = {}
    p["w1"] = _orthogonal(ks[0], num_inputs, H, gain)
    p["b1"] = jnp.zeros((1, H), jnp.float32)
    p["w2"] = _orthogonal(ks[1], H, H, gain)
    p["b2"] = jnp.zeros((1, H), jnp.float32)
    p["wa1"] = _orthogonal(ks[2], H, H, gain)
    p["ba1"] = jnp.zeros((1, H), jnp.float32)
    p["wa2"] = _orthogonal(ks[3], H, num_outputs * n_devices, gain)
    p["ba2"] = jnp.zeros((1, num_outputs * n_devices), jnp.float32)
    p["wv1"] = _orthogonal(ks[4], H, H, gain)
    p["bv1"] = jnp.zeros((1, H), jnp.float32)
    p["wv2"] = _orthogonal(ks[5], H, n_devices, gain)
    p["bv2"] = jnp.zeros((1, n_devices), jnp.float32)
    return p


# ----------------------------------------------------------------------------
# Pure-JAX reference (original, un-folded semantics) for the correctness check
# ----------------------------------------------------------------------------
def bdq_reference(x, p, *, n_devices, num_outputs):
    if x.ndim == 1:
        x = x[None, :]
    relu = lambda t: jnp.maximum(t, 0.0)
    h = relu(x @ p["w1"] + p["b1"])
    h = relu(h @ p["w2"] + p["b2"])
    adv = relu(h @ p["wa1"] + p["ba1"]) @ p["wa2"] + p["ba2"]
    val = relu(h @ p["wv1"] + p["bv1"]) @ p["wv2"] + p["bv2"]
    adv = adv.reshape(x.shape[0], n_devices, num_outputs)
    val = val[..., None]
    return val + adv - jnp.mean(adv, axis=-1, keepdims=True)


if __name__ == "__main__":
    batch = 8
    num_inputs = 32
    num_outputs = 8
    n_devices = 4

    key = jax.random.PRNGKey(0)
    k_x, k_p = jax.random.split(key)

    x = jax.random.normal(k_x, (batch, num_inputs), dtype=jnp.float32)
    raw_params = init_bdq_params(k_p, num_inputs, num_outputs, n_devices)
    folded = fold_bdq_params(raw_params, n_devices=n_devices,
                             num_outputs=num_outputs)

    out = bdq_forward(x, folded, n_devices=n_devices, num_outputs=num_outputs)
    out = jax.block_until_ready(out)

    ref = bdq_reference(x, raw_params, n_devices=n_devices,
                        num_outputs=num_outputs)

    assert out.shape == (batch, n_devices, num_outputs)
    # Slightly looser tolerance than before: the dueling mean-subtraction is now
    # folded into the weights, so MXU rounding differs marginally from the
    # post-matmul-subtraction reference.
    max_err = float(jnp.max(jnp.abs(out - ref)))
    assert jnp.allclose(out, ref, atol=5e-2, rtol=1e-2), max_err

    print("KERNEL_OK")
</pallas_src>

<mosaic_0001>
module attributes {stable_mosaic.version = 11 : i64} {
  func.func @_bdq_kernel(%arg0: i32, %arg1: memref<8x32xf32, #tpu.memory_space<vmem>>, %arg2: memref<32x128xf32, #tpu.memory_space<vmem>>, %arg3: memref<128x384xf32, #tpu.memory_space<vmem>>, %arg4: memref<256x32xf32, #tpu.memory_space<vmem>>, %arg5: memref<4x256xf32, #tpu.memory_space<vmem>>, %arg6: memref<8x32xf32, #tpu.memory_space<vmem>>) attributes {dimension_semantics = [#tpu.dimension_semantics<parallel>], iteration_bounds = array<i64: 1>, scalar_prefetch = 0 : i64, scratch_operands = 0 : i64, tpu.core_type = #tpu.core_type<tc>, window_params = [{transform_indices = @transform_0, window_bounds = array<i64: 8, 32>}, {pipeline_mode = #tpu.pipeline_mode<synchronous>, transform_indices = @transform_1, window_bounds = array<i64: 32, 128>}, {pipeline_mode = #tpu.pipeline_mode<synchronous>, transform_indices = @transform_2, window_bounds = array<i64: 128, 384>}, {pipeline_mode = #tpu.pipeline_mode<synchronous>, transform_indices = @transform_3, window_bounds = array<i64: 256, 32>}, {pipeline_mode = #tpu.pipeline_mode<synchronous>, transform_indices = @transform_4, window_bounds = array<i64: 4, 256>}, {transform_indices = @transform_5, window_bounds = array<i64: 8, 32>}]} {
    %c0 = arith.constant 0 : index
    %c0_0 = arith.constant 0 : index
    %0 = vector.load %arg1[%c0, %c0_0] : memref<8x32xf32, #tpu.memory_space<vmem>>, vector<8x32xf32>
    %c0_1 = arith.constant 0 : index
    %c0_2 = arith.constant 0 : index
    %1 = vector.load %arg5[%c0_1, %c0_2] : memref<4x256xf32, #tpu.memory_space<vmem>>, vector<1x128xf32>
    %c1 = arith.constant 1 : index
    %c0_3 = arith.constant 0 : index
    %2 = vector.load %arg5[%c1, %c0_3] : memref<4x256xf32, #tpu.memory_space<vmem>>, vector<1x128xf32>
    %c2 = arith.constant 2 : index
    %c0_4 = arith.constant 0 : index
    %3 = vector.load %arg5[%c2, %c0_4] : memref<4x256xf32, #tpu.memory_space<vmem>>, vector<1x256xf32>
    %c3 = arith.constant 3 : index
    %c0_5 = arith.constant 0 : index
    %4 = vector.load %arg5[%c3, %c0_5] : memref<4x256xf32, #tpu.memory_space<vmem>>, vector<1x32xf32>
    %c0_6 = arith.constant 0 : index
    %c0_7 = arith.constant 0 : index
    %5 = vector.load %arg2[%c0_6, %c0_7] : memref<32x128xf32, #tpu.memory_space<vmem>>, vector<32x128xf32>
    %cst = arith.constant dense<0.000000e+00> : vector<8x128xf32>
    %6 = tpu.matmul %0, %5, %cst {dimension_numbers = #tpu.dot_dimension_numbers<[1], [0], [0], [1], [0, 0, 1, 1], [], []>} : vector<8x32xf32>, vector<32x128xf32>, vector<8x128xf32> -> vector<8x128xf32>
    %7 = vector.broadcast %1 : vector<1x128xf32> to vector<8x128xf32>
    %8 = arith.addf %6, %7 : vector<8x128xf32>
    %cst_8 = arith.constant 0.000000e+00 : f32
    %9 = vector.broadcast %cst_8 : f32 to vector<8x128xf32>
    %10 = arith.maximumf %8, %9 : vector<8x128xf32>
    %c0_9 = arith.constant 0 : index
    %c0_10 = arith.constant 0 : index
    %11 = vector.load %arg3[%c0_9, %c0_10] : memref<128x384xf32, #tpu.memory_space<vmem>>, vector<128x128xf32>
    %cst_11 = arith.constant dense<0.000000e+00> : vector<8x128xf32>
    %12 = tpu.matmul %10, %11, %cst_11 {dimension_numbers = #tpu.dot_dimension_numbers<[1], [0], [0], [1], [0, 0, 1, 1], [], []>} : vector<8x128xf32>, vector<128x128xf32>, vector<8x128xf32> -> vector<8x128xf32>
    %13 = vector.broadcast %2 : vector<1x128xf32> to vector<8x128xf32>
    %14 = arith.addf %12, %13 : vector<8x128xf32>
    %cst_12 = arith.constant 0.000000e+00 : f32
    %15 = vector.broadcast %cst_12 : f32 to vector<8x128xf32>
    %16 = arith.maximumf %14, %15 : vector<8x128xf32>
    %c0_13 = arith.constant 0 : index
    %c128 = arith.constant 128 : index
    %17 = vector.load %arg3[%c0_13, %c128] : memref<128x384xf32, #tpu.memory_space<vmem>>, vector<128x256xf32>
    %cst_14 = arith.constant dense<0.000000e+00> : vector<8x256xf32>
    %18 = tpu.matmul %16, %17, %cst_14 {dimension_numbers = #tpu.dot_dimension_numbers<[1], [0], [0], [1], [0, 0, 1, 1], [], []>} : vector<8x128xf32>, vector<128x256xf32>, vector<8x256xf32> -> vector<8x256xf32>
    %19 = vector.broadcast %3 : vector<1x256xf32> to vector<8x256xf32>
    %20 = arith.addf %18, %19 : vector<8x256xf32>
    %cst_15 = arith.constant 0.000000e+00 : f32
    %21 = vector.broadcast %cst_15 : f32 to vector<8x256xf32>
    %22 = arith.maximumf %20, %21 : vector<8x256xf32>
    %c0_16 = arith.constant 0 : index
    %c0_17 = arith.constant 0 : index
    %23 = vector.load %arg4[%c0_16, %c0_17] : memref<256x32xf32, #tpu.memory_space<vmem>>, vector<256x32xf32>
    %cst_18 = arith.constant dense<0.000000e+00> : vector<8x32xf32>
    %24 = tpu.matmul %22, %23, %cst_18 {dimension_numbers = #tpu.dot_dimension_numbers<[1], [0], [0], [1], [0, 0, 1, 1], [], []>} : vector<8x256xf32>, vector<256x32xf32>, vector<8x32xf32> -> vector<8x32xf32>
    %25 = vector.broadcast %4 : vector<1x32xf32> to vector<8x32xf32>
    %26 = arith.addf %24, %25 : vector<8x32xf32>
    %c0_19 = arith.constant 0 : index
    %c0_20 = arith.constant 0 : index
    %27 = vector.load %arg6[%c0_19, %c0_20] : memref<8x32xf32, #tpu.memory_space<vmem>>, vector<8x32xf32>
    tpu.vector_store %arg6[%c0_19, %c0_20], %26 {strides = array<i32>} : memref<8x32xf32, #tpu.memory_space<vmem>>, vector<8x32xf32>,
    return
  }
  func.func @transform_0(%arg0: i32) -> (i32, i32) {
    %c0_i32 = arith.constant 0 : i32
    %c0_i32_0 = arith.constant 0 : i32
    return %arg0, %c0_i32 : i32, i32
  }
  func.func @transform_1(%arg0: i32) -> (i32, i32) {
    %c0_i32 = arith.constant 0 : i32
    %c0_i32_0 = arith.constant 0 : i32
    %c0_i32_1 = arith.constant 0 : i32
    return %c0_i32, %c0_i32_0 : i32, i32
  }
  func.func @transform_2(%arg0: i32) -> (i32, i32) {
    %c0_i32 = arith.constant 0 : i32
    %c0_i32_0 = arith.constant 0 : i32
    %c0_i32_1 = arith.constant 0 : i32
    return %c0_i32, %c0_i32_0 : i32, i32
  }
  func.func @transform_3(%arg0: i32) -> (i32, i32) {
    %c0_i32 = arith.constant 0 : i32
    %c0_i32_0 = arith.constant 0 : i32
    %c0_i32_1 = arith.constant 0 : i32
    return %c0_i32, %c0_i32_0 : i32, i32
  }
  func.func @transform_4(%arg0: i32) -> (i32, i32) {
    %c0_i32 = arith.constant 0 : i32
    %c0_i32_0 = arith.constant 0 : i32
    %c0_i32_1 = arith.constant 0 : i32
    return %c0_i32, %c0_i32_0 : i32, i32
  }
  func.func @transform_5(%arg0: i32) -> (i32, i32) {
    %c0_i32 = arith.constant 0 : i32
    %c0_i32_0 = arith.constant 0 : i32
    return %arg0, %c0_i32 : i32, i32
  }
}

</mosaic_0001>

<llo_original>
// kernel: tpu_custom_call.1
$region0: #{tpu_custom_call.1}
  #allocation0 [shape = 'u32[]', space=smem, size = 0x4, offset = 0x4, fixed_abs, tag = 'smem constant byte address 0x4 - core index']
  #allocation1 [shape = 'u32[144,128]{1,0:T(1,128)}', space=vmem, size = 0x12000, scoped, tag = 'internal scratch']
  %s0 = inlined_call_operand.vmem [shape: f32[8,32], index: 0, kind: input, shape index: {}]
  %s1 = inlined_call_operand.vmem [shape: f32[32,128], index: 1, kind: input, shape index: {}]
  %s2 = inlined_call_operand.hbm [shape: f32[128,384], index: 2, kind: input, shape index: {}]
  %s3 = inlined_call_operand.vmem [shape: f32[256,32], index: 3, kind: input, shape index: {}]
  %s4 = inlined_call_operand.vmem [shape: f32[4,256], index: 4, kind: input, shape index: {}]
  %s5 = inlined_call_operand.hbm [shape: f32[8,32], index: 5, kind: output, shape index: {}]
  %s6 = sld [smem:[#allocation0]]
  $region34: #{tpu_custom_call.1} parent=0
    _
  %s8 = ssub.s32 1, %s6
  %s9 = scalar_select 0, %s8, %s6
  $region1: #{tpu_custom_call.1} parent=0
    #allocation2 [shape = 'u8[196608]{0}', space=vmem, size = 0x30000, scoped, tag = 'input window, operand 2, single buffered']
    #allocation3 [shape = 's32[1]{0}', space=sflag, size = 0x4, scoped, tag = 'scoped memory for tpu_custom_call.1']
    #allocation4 [shape = 's32[1]{0}', space=sflag, size = 0x4, scoped, tag = 'scoped memory for tpu_custom_call.1']
    #allocation5 [shape = 'u8[4096]{0}', space=vmem, size = 0x1000, scoped, tag = 'output window, operand 0, single buffered']
    %10 = vsyncpa [#allocation3], 0
    %11 = vsyncpa [#allocation4], 0
    // Predicated region
    $region2: #{tpu_custom_call.1} parent=1 // pred_check
      _
    $region3: #{tpu_custom_call.1} parent=1 // pred_check_branch
      %13 = sbr.rel (0) target = $region5
    $region4: #{tpu_custom_call.1} parent=1 // pred_region
      _
    $region5: #{tpu_custom_call.1} parent=1 // pred_fallthru
      _
    // Predicated region
    $region6: #{tpu_custom_call.1} parent=1 // pred_check
      _
    $region7: #{tpu_custom_call.1} parent=1 // pred_check_branch
      %15 = sbr.rel (0) target = $region9
    $region8: #{tpu_custom_call.1} parent=1 // pred_region
      _
    $region9: #{tpu_custom_call.1} parent=1 // pred_fallthru
      _
    // Predicated region
    $region10: #{tpu_custom_call.1} parent=1 // pred_check
      _
    $region11: #{tpu_custom_call.1} parent=1 // pred_check_branch
      %17 = sbr.rel (0) target = $region13
    $region12: #{tpu_custom_call.1} parent=1 // pred_region
      %s19 = ssub.s32 6144, 6144
      %20 = vsyncadd [#allocation3], %s19
      %s21 = sshll.u32 [#allocation2], 4
      %s22 = int_to_ptr.vmem [resolvable:$true] %s21
      %27 = dma.hbm_to_vmem [thread:$0]  %s2, 6144, %s22, [#allocation3], 384, 384, 24
    $region13: #{tpu_custom_call.1} parent=1 // pred_fallthru
      _
    // Predicated region
    $region14: #{tpu_custom_call.1} parent=1 // pred_check
      _
    $region15: #{tpu_custom_call.1} parent=1 // pred_check_branch
      %29 = sbr.rel (0) target = $region17
    $region16: #{tpu_custom_call.1} parent=1 // pred_region
      _
    $region17: #{tpu_custom_call.1} parent=1 // pred_fallthru
      _
    // Predicated region
    $region18: #{tpu_custom_call.1} parent=1 // pred_check
      _
    $region19: #{tpu_custom_call.1} parent=1 // pred_check_branch
      %31 = sbr.rel (0) target = $region21
    $region20: #{tpu_custom_call.1} parent=1 // pred_region
      _
    $region21: #{tpu_custom_call.1} parent=1 // pred_fallthru
      _
    // Predicated region
    $region22: #{tpu_custom_call.1} parent=1 // pred_check
      _
    $region23: #{tpu_custom_call.1} parent=1 // pred_check_branch
      %33 = sbr.rel (0) target = $region25
    $region24: #{tpu_custom_call.1} parent=1 // pred_region
      %34 = dma.done [#allocation3], 6144
    $region25: #{tpu_custom_call.1} parent=1 // pred_fallthru
      _
    %v35 = vld [vmem:[%s0] sm:$0xff]
    %v36 = vld [vmem:[%s4] sm:$0x1]
    %v37 = vld [vmem:[%s4 + $0x1] sm:$0x1]
    %s38 = scalar_lea.vmem %s4, 2
    %v39 = vld [vmem:[%s38] ss:$4 sm:$0x3]
    %v40 = vld [vmem:[%s4 + $0x3] sm:$0x1]
    %v41 = vld [vmem:[%s1] sm:$0xff]
    %v42 = vld [vmem:[%s1 + $0x8] sm:$0xff]
    %v43 = vld [vmem:[%s1 + $0x10] sm:$0xff]
    %v44 = vld [vmem:[%s1 + $0x18] sm:$0xff]
    %v45 = vlaneseq
    %v46 = vshrl.u32 %v45, 7
    %v47 = vsub.s32 0, %v46
    %v48 = vrot.slane %v36, %v47
    %vm49 = vcmask 261120
    %v51 = vsel %vm49, %v35, 0
    %53 = vmatprep.subr.mxu0 0.0
    %54 = vmatpush1.msra.mxu0 %v41
    %55 = vmatprep.subr.mxu0 0.0
    %56 = vmatpush1.msra.mxu0 %v42
    %57 = vmatprep.subr.mxu0 0.0
    %58 = vmatpush1.msra.mxu0 %v43
    %59 = vmatprep.subr.mxu0 0.0
    %60 = vmatpush1.msra.mxu0 %v44
    %61 = vmatprep.subr.mxu0 0.0
    %62 = vmatpush1.msra.mxu0 0.0
    %63 = vmatprep.subr.mxu0 0.0
    %64 = vmatpush1.msra.mxu0 0.0
    %65 = vmatprep.subr.mxu0 0.0
    %66 = vmatpush1.msra.mxu0 0.0
    %67 = vmatprep.subr.mxu0 0.0
    %68 = vmatpush1.msra.mxu0 0.0
    %69 = vmatprep.subr.mxu0 0.0
    %70 = vmatpush1.msra.mxu0 0.0
    %71 = vmatprep.subr.mxu0 0.0
    %72 = vmatpush1.msra.mxu0 0.0
    %73 = vmatprep.subr.mxu0 0.0
    %74 = vmatpush1.msra.mxu0 0.0
    %75 = vmatprep.subr.mxu0 0.0
    %76 = vmatpush1.msra.mxu0 0.0
    %77 = vmatprep.subr.mxu0 0.0
    %78 = vmatpush1.msra.mxu0 0.0
    %79 = vmatprep.subr.mxu0 0.0
    %80 = vmatpush1.msra.mxu0 0.0
    %81 = vmatprep.subr.mxu0 0.0
    %82 = vmatpush1.msra.mxu0 0.0
    %83 = vmatprep.subr.mxu0 0.0
    %84 = vmatpush1.msra.mxu0 0.0
    %85 = vmatprep.subr.mxu0 0.0
    %86 = vmatpush1.msra.mxu0 0.0
    %87 = vmatprep.subr.mxu0 0.0
    %88 = vmatpush1.msra.mxu0 0.0
    %89 = vmatprep.subr.mxu0 0.0
    %90 = vmatpush1.msra.mxu0 0.0
    %91 = vmatprep.subr.mxu0 0.0
    %92 = vmatpush1.msra.mxu0 0.0
    %93 = vmatprep.subr.mxu0 0.0
    %94 = vmatpush1.msra.mxu0 0.0
    %95 = vmatprep.subr.mxu0 0.0
    %96 = vmatpush1.msra.mxu0 0.0
    %97 = vmatprep.subr.mxu0 0.0
    %98 = vmatpush1.msra.mxu0 0.0
    %99 = vmatprep.subr.mxu0 0.0
    %100 = vmatpush1.msra.mxu0 0.0
    %101 = vmatprep.subr.mxu0 0.0
    %102 = vmatpush1.msra.mxu0 0.0
    %103 = vmatprep.subr.mxu0 0.0
    %104 = vmatpush1.msra.mxu0 0.0
    %105 = vmatprep.subr.mxu0 0.0
    %106 = vmatpush1.msra.mxu0 0.0
    %107 = vmatprep.subr.mxu0 0.0
    %108 = vmatpush1.msra.mxu0 0.0
    %109 = vmatprep.subr.mxu0 0.0
    %110 = vmatpush1.msra.mxu0 0.0
    %111 = vmatprep.subr.mxu0 0.0
    %112 = vmatpush1.msra.mxu0 0.0
    %113 = vmatprep.subr.mxu0 0.0
    %114 = vmatpush1.msra.mxu0 0.0
    %115 = vmatprep.subr.mxu0 0.0
    %116 = vmatpush1.msra.mxu0 0.0
    %117 = vmatprep.mubr.f32.mxu0 0.0
    %118 = vmatmul.mubr.f32.gmra.mrb[0].mxu0 %v51
    %v119 = vpop.f32.mrb[0].mxu0
    %v120 = vadd.f32 %v48, %v119
    %v121 = vpop.f32.mrb[0].mxu0
    %122 = vdwg.mxu0
    %v123 = vmax.f32 %v120, 0.0
    %v124 = vld [vmem:[#allocation2] sm:$0xff]
    %v125 = vld [vmem:[#allocation2 + $0x18] sm:$0xff]
    %v126 = vld [vmem:[#allocation2 + $0x30] sm:$0xff]
    %v127 = vld [vmem:[#allocation2 + $0x48] sm:$0xff]
    %v128 = vld [vmem:[#allocation2 + $0x60] sm:$0xff]
    %v129 = vld [vmem:[#allocation2 + $0x78] sm:$0xff]
    %v130 = vld [vmem:[#allocation2 + $0x90] sm:$0xff]
    %v131 = vld [vmem:[#allocation2 + $0xa8] sm:$0xff]
    %v132 = vld [vmem:[#allocation2 + $0xc0] sm:$0xff]
    %v133 = vld [vmem:[#allocation2 + $0xd8] sm:$0xff]
    %v134 = vld [vmem:[#allocation2 + $0xf0] sm:$0xff]
    %v135 = vld [vmem:[#allocation2 + $0x108] sm:$0xff]
    %v136 = vld [vmem:[#allocation2 + $0x120] sm:$0xff]
    %v137 = vld [vmem:[#allocation2 + $0x138] sm:$0xff]
    %v138 = vld [vmem:[#allocation2 + $0x150] sm:$0xff]
    %v139 = vld [vmem:[#allocation2 + $0x168] sm:$0xff]
    %v140 = vlaneseq
    %v141 = vshrl.u32 %v140, 7
    %v142 = vsub.s32 0, %v141
    %v143 = vrot.slane %v37, %v142
    %144 = vmatprep.subr.mxu0 0.0
    %145 = vmatpush1.msra.mxu0 %v124
    %146 = vmatprep.subr.mxu0 0.0
    %147 = vmatpush1.msra.mxu0 %v125
    %148 = vmatprep.subr.mxu0 0.0
    %149 = vmatpush1.msra.mxu0 %v126
    %150 = vmatprep.subr.mxu0 0.0
    %151 = vmatpush1.msra.mxu0 %v127
    %152 = vmatprep.subr.mxu0 0.0
    %153 = vmatpush1.msra.mxu0 %v128
    %154 = vmatprep.subr.mxu0 0.0
    %155 = vmatpush1.msra.mxu0 %v129
    %156 = vmatprep.subr.mxu0 0.0
    %157 = vmatpush1.msra.mxu0 %v130
    %158 = vmatprep.subr.mxu0 0.0
    %159 = vmatpush1.msra.mxu0 %v131
    %160 = vmatprep.subr.mxu0 0.0
    %161 = vmatpush1.msra.mxu0 %v132
    %162 = vmatprep.subr.mxu0 0.0
    %163 = vmatpush1.msra.mxu0 %v133
    %164 = vmatprep.subr.mxu0 0.0
    %165 = vmatpush1.msra.mxu0 %v134
    %166 = vmatprep.subr.mxu0 0.0
    %167 = vmatpush1.msra.mxu0 %v135
    %168 = vmatprep.subr.mxu0 0.0
    %169 = vmatpush1.msra.mxu0 %v136
    %170 = vmatprep.subr.mxu0 0.0
    %171 = vmatpush1.msra.mxu0 %v137
    %172 = vmatprep.subr.mxu0 0.0
    %173 = vmatpush1.msra.mxu0 %v138
    %174 = vmatprep.subr.mxu0 0.0
    %175 = vmatpush1.msra.mxu0 %v139
    %176 = vmatprep.subr.mxu0 0.0
    %177 = vmatpush1.msra.mxu0 0.0
    %178 = vmatprep.subr.mxu0 0.0
    %179 = vmatpush1.msra.mxu0 0.0
    %180 = vmatprep.subr.mxu0 0.0
    %181 = vmatpush1.msra.mxu0 0.0
    %182 = vmatprep.subr.mxu0 0.0
    %183 = vmatpush1.msra.mxu0 0.0
    %184 = vmatprep.subr.mxu0 0.0
    %185 = vmatpush1.msra.mxu0 0.0
    %186 = vmatprep.subr.mxu0 0.0
    %187 = vmatpush1.msra.mxu0 0.0
    %188 = vmatprep.subr.mxu0 0.0
    %189 = vmatpush1.msra.mxu0 0.0
    %190 = vmatprep.subr.mxu0 0.0
    %191 = vmatpush1.msra.mxu0 0.0
    %192 = vmatprep.subr.mxu0 0.0
    %193 = vmatpush1.msra.mxu0 0.0
    %194 = vmatprep.subr.mxu0 0.0
    %195 = vmatpush1.msra.mxu0 0.0
    %196 = vmatprep.subr.mxu0 0.0
    %197 = vmatpush1.msra.mxu0 0.0
    %198 = vmatprep.subr.mxu0 0.0
    %199 = vmatpush1.msra.mxu0 0.0
    %200 = vmatprep.subr.mxu0 0.0
    %201 = vmatpush1.msra.mxu0 0.0
    %202 = vmatprep.subr.mxu0 0.0
    %203 = vmatpush1.msra.mxu0 0.0
    %204 = vmatprep.subr.mxu0 0.0
    %205 = vmatpush1.msra.mxu0 0.0
    %206 = vmatprep.subr.mxu0 0.0
    %207 = vmatpush1.msra.mxu0 0.0
    %208 = vmatprep.mubr.f32.mxu0 0.0
    %209 = vmatmul.mubr.f32.gmra.mrb[0].mxu0 %v123
    %v210 = vpop.f32.mrb[0].mxu0
    %v211 = vadd.f32 %v143, %v210
    %v212 = vpop.f32.mrb[0].mxu0
    %213 = vdwg.mxu0
    %v214 = vmax.f32 %v211, 0.0
    %v215 = vld [vmem:[#allocation2 + $0x8] sm:$0xff]
    %v216 = vld [vmem:[#allocation2 + $0x10] sm:$0xff]
    %v217 = vld [vmem:[#allocation2 + $0x20] sm:$0xff]
    %v218 = vld [vmem:[#allocation2 + $0x28] sm:$0xff]
    %v219 = vld [vmem:[#allocation2 + $0x38] sm:$0xff]
    %v220 = vld [vmem:[#allocation2 + $0x40] sm:$0xff]
    %v221 = vld [vmem:[#allocation2 + $0x50] sm:$0xff]
    %v222 = vld [vmem:[#allocation2 + $0x58] sm:$0xff]
    %v223 = vld [vmem:[#allocation2 + $0x68] sm:$0xff]
    %v224 = vld [vmem:[#allocation2 + $0x70] sm:$0xff]
    %v225 = vld [vmem:[#allocation2 + $0x80] sm:$0xff]
    %v226 = vld [vmem:[#allocation2 + $0x88] sm:$0xff]
    %v227 = vld [vmem:[#allocation2 + $0x98] sm:$0xff]
    %v228 = vld [vmem:[#allocation2 + $0xa0] sm:$0xff]
    %v229 = vld [vmem:[#allocation2 + $0xb0] sm:$0xff]
    %v230 = vld [vmem:[#allocation2 + $0xb8] sm:$0xff]
    %v231 = vld [vmem:[#allocation2 + $0xc8] sm:$0xff]
    %v232 = vld [vmem:[#allocation2 + $0xd0] sm:$0xff]
    %v233 = vld [vmem:[#allocation2 + $0xe0] sm:$0xff]
    %v234 = vld [vmem:[#allocation2 + $0xe8] sm:$0xff]
    %v235 = vld [vmem:[#allocation2 + $0xf8] sm:$0xff]
    %v236 = vld [vmem:[#allocation2 + $0x100] sm:$0xff]
    %v237 = vld [vmem:[#allocation2 + $0x110] sm:$0xff]
    %v238 = vld [vmem:[#allocation2 + $0x118] sm:$0xff]
    %v239 = vld [vmem:[#allocation2 + $0x128] sm:$0xff]
    %v240 = vld [vmem:[#allocation2 + $0x130] sm:$0xff]
    %v241 = vld [vmem:[#allocation2 + $0x140] sm:$0xff]
    %v242 = vld [vmem:[#allocation2 + $0x148] sm:$0xff]
    %v243 = vld [vmem:[#allocation2 + $0x158] sm:$0xff]
    %v244 = vld [vmem:[#allocation2 + $0x160] sm:$0xff]
    %v245 = vld [vmem:[#allocation2 + $0x170] sm:$0xff]
    %v246 = vld [vmem:[#allocation2 + $0x178] sm:$0xff]
    %v248 = vlaneseq
    %v249 = vshrl.u32 %v248, 7
    %v250 = vsub.s32 0, %v249
    %v251 = vrot.slane %v39, %v250
    %v252 = vlaneseq
    %v253 = vshrl.u32 %v252, 7
    %v254 = vsub.s32 1, %v253
    %v255 = vrot.slane %v39, %v254
    %258 = vmatprep.subr.mxu0 %v216
    %259 = vmatpush1.msra.mxu0 %v215
    %260 = vmatprep.subr.mxu0 %v218
    %261 = vmatpush1.msra.mxu0 %v217
    %262 = vmatprep.subr.mxu0 %v220
    %263 = vmatpush1.msra.mxu0 %v219
    %264 = vmatprep.subr.mxu0 %v222
    %265 = vmatpush1.msra.mxu0 %v221
    %266 = vmatprep.subr.mxu0 %v224
    %267 = vmatpush1.msra.mxu0 %v223
    %268 = vmatprep.subr.mxu0 %v226
    %269 = vmatpush1.msra.mxu0 %v225
    %270 = vmatprep.subr.mxu0 %v228
    %271 = vmatpush1.msra.mxu0 %v227
    %272 = vmatprep.subr.mxu0 %v230
    %273 = vmatpush1.msra.mxu0 %v229
    %274 = vmatprep.subr.mxu0 %v232
    %275 = vmatpush1.msra.mxu0 %v231
    %276 = vmatprep.subr.mxu0 %v234
    %277 = vmatpush1.msra.mxu0 %v233
    %278 = vmatprep.subr.mxu0 %v236
    %279 = vmatpush1.msra.mxu0 %v235
    %280 = vmatprep.subr.mxu0 %v238
    %281 = vmatpush1.msra.mxu0 %v237
    %282 = vmatprep.subr.mxu0 %v240
    %283 = vmatpush1.msra.mxu0 %v239
    %284 = vmatprep.subr.mxu0 %v242
    %285 = vmatpush1.msra.mxu0 %v241
    %286 = vmatprep.subr.mxu0 %v244
    %287 = vmatpush1.msra.mxu0 %v243
    %288 = vmatprep.subr.mxu0 %v246
    %289 = vmatpush1.msra.mxu0 %v245
    %290 = vmatprep.subr.mxu0 0.0
    %291 = vmatpush1.msra.mxu0 0.0
    %292 = vmatprep.subr.mxu0 0.0
    %293 = vmatpush1.msra.mxu0 0.0
    %294 = vmatprep.subr.mxu0 0.0
    %295 = vmatpush1.msra.mxu0 0.0
    %296 = vmatprep.subr.mxu0 0.0
    %297 = vmatpush1.msra.mxu0 0.0
    %298 = vmatprep.subr.mxu0 0.0
    %299 = vmatpush1.msra.mxu0 0.0
    %300 = vmatprep.subr.mxu0 0.0
    %301 = vmatpush1.msra.mxu0 0.0
    %302 = vmatprep.subr.mxu0 0.0
    %303 = vmatpush1.msra.mxu0 0.0
    %304 = vmatprep.subr.mxu0 0.0
    %305 = vmatpush1.msra.mxu0 0.0
    %306 = vmatprep.subr.mxu0 0.0
    %307 = vmatpush1.msra.mxu0 0.0
    %308 = vmatprep.subr.mxu0 0.0
    %309 = vmatpush1.msra.mxu0 0.0
    %310 = vmatprep.subr.mxu0 0.0
    %311 = vmatpush1.msra.mxu0 0.0
    %312 = vmatprep.subr.mxu0 0.0
    %313 = vmatpush1.msra.mxu0 0.0
    %314 = vmatprep.subr.mxu0 0.0
    %315 = vmatpush1.msra.mxu0 0.0
    %316 = vmatprep.subr.mxu0 0.0
    %317 = vmatpush1.msra.mxu0 0.0
    %318 = vmatprep.subr.mxu0 0.0
    %319 = vmatpush1.msra.mxu0 0.0
    %320 = vmatprep.subr.mxu0 0.0
    %321 = vmatpush1.msra.mxu0 0.0
    %322 = vmatprep.mubr.f32.mxu0 0.0
    %323 = vmatmul.mubr.f32.gmra.mrb[0].mxu0 %v214
    %v324 = vpop.f32.mrb[0].mxu0
    %v325 = vadd.f32 %v251, %v324
    %v326 = vpop.f32.mrb[0].mxu0
    %v327 = vadd.f32 %v255, %v326
    %328 = vdwg.mxu0
    %v329 = vmax.f32 %v325, 0.0
    %v330 = vmax.f32 %v327, 0.0
    %v331 = vld [vmem:[%s3] sm:$0xff]
    %v332 = vld [vmem:[%s3 + $0x8] sm:$0xff]
    %v333 = vld [vmem:[%s3 + $0x10] sm:$0xff]
    %v334 = vld [vmem:[%s3 + $0x18] sm:$0xff]
    %v335 = vld [vmem:[%s3 + $0x20] sm:$0xff]
    %v336 = vld [vmem:[%s3 + $0x28] sm:$0xff]
    %v337 = vld [vmem:[%s3 + $0x30] sm:$0xff]
    %v338 = vld [vmem:[%s3 + $0x38] sm:$0xff]
    %v339 = vld [vmem:[%s3 + $0x40] sm:$0xff]
    %v340 = vld [vmem:[%s3 + $0x48] sm:$0xff]
    %v341 = vld [vmem:[%s3 + $0x50] sm:$0xff]
    %v342 = vld [vmem:[%s3 + $0x58] sm:$0xff]
    %v343 = vld [vmem:[%s3 + $0x60] sm:$0xff]
    %v344 = vld [vmem:[%s3 + $0x68] sm:$0xff]
    %v345 = vld [vmem:[%s3 + $0x70] sm:$0xff]
    %v346 = vld [vmem:[%s3 + $0x78] sm:$0xff]
    %v347 = vld [vmem:[%s3 + $0x80] sm:$0xff]
    %v348 = vld [vmem:[%s3 + $0x88] sm:$0xff]
    %v349 = vld [vmem:[%s3 + $0x90] sm:$0xff]
    %v350 = vld [vmem:[%s3 + $0x98] sm:$0xff]
    %v351 = vld [vmem:[%s3 + $0xa0] sm:$0xff]
    %v352 = vld [vmem:[%s3 + $0xa8] sm:$0xff]
    %v353 = vld [vmem:[%s3 + $0xb0] sm:$0xff]
    %v354 = vld [vmem:[%s3 + $0xb8] sm:$0xff]
    %v355 = vld [vmem:[%s3 + $0xc0] sm:$0xff]
    %v356 = vld [vmem:[%s3 + $0xc8] sm:$0xff]
    %v357 = vld [vmem:[%s3 + $0xd0] sm:$0xff]
    %v358 = vld [vmem:[%s3 + $0xd8] sm:$0xff]
    %v359 = vld [vmem:[%s3 + $0xe0] sm:$0xff]
    %v360 = vld [vmem:[%s3 + $0xe8] sm:$0xff]
    %v361 = vld [vmem:[%s3 + $0xf0] sm:$0xff]
    %v362 = vld [vmem:[%s3 + $0xf8] sm:$0xff]
    %v363 = vlaneseq
    %v364 = vshrl.u32 %v363, 7
    %v365 = vsub.s32 0, %v364
    %v366 = vrot.slane %v40, %v365
    %367 = vmatprep.subr.mxu0 0.0
    %368 = vmatpush1.msra.mxu0 %v331
    %369 = vmatprep.subr.mxu0 0.0
    %370 = vmatpush1.msra.mxu0 %v332
    %371 = vmatprep.subr.mxu0 0.0
    %372 = vmatpush1.msra.mxu0 %v333
    %373 = vmatprep.subr.mxu0 0.0
    %374 = vmatpush1.msra.mxu0 %v334
    %375 = vmatprep.subr.mxu0 0.0
    %376 = vmatpush1.msra.mxu0 %v335
    %377 = vmatprep.subr.mxu0 0.0
    %378 = vmatpush1.msra.mxu0 %v336
    %379 = vmatprep.subr.mxu0 0.0
    %380 = vmatpush1.msra.mxu0 %v337
    %381 = vmatprep.subr.mxu0 0.0
    %382 = vmatpush1.msra.mxu0 %v338
    %383 = vmatprep.subr.mxu0 0.0
    %384 = vmatpush1.msra.mxu0 %v339
    %385 = vmatprep.subr.mxu0 0.0
    %386 = vmatpush1.msra.mxu0 %v340
    %387 = vmatprep.subr.mxu0 0.0
    %388 = vmatpush1.msra.mxu0 %v341
    %389 = vmatprep.subr.mxu0 0.0
    %390 = vmatpush1.msra.mxu0 %v342
    %391 = vmatprep.subr.mxu0 0.0
    %392 = vmatpush1.msra.mxu0 %v343
    %393 = vmatprep.subr.mxu0 0.0
    %394 = vmatpush1.msra.mxu0 %v344
    %395 = vmatprep.subr.mxu0 0.0
    %396 = vmatpush1.msra.mxu0 %v345
    %397 = vmatprep.subr.mxu0 0.0
    %398 = vmatpush1.msra.mxu0 %v346
    %399 = vmatprep.subr.mxu0 0.0
    %400 = vmatpush1.msra.mxu0 %v347
    %401 = vmatprep.subr.mxu0 0.0
    %402 = vmatpush1.msra.mxu0 %v348
    %403 = vmatprep.subr.mxu0 0.0
    %404 = vmatpush1.msra.mxu0 %v349
    %405 = vmatprep.subr.mxu0 0.0
    %406 = vmatpush1.msra.mxu0 %v350
    %407 = vmatprep.subr.mxu0 0.0
    %408 = vmatpush1.msra.mxu0 %v351
    %409 = vmatprep.subr.mxu0 0.0
    %410 = vmatpush1.msra.mxu0 %v352
    %411 = vmatprep.subr.mxu0 0.0
    %412 = vmatpush1.msra.mxu0 %v353
    %413 = vmatprep.subr.mxu0 0.0
    %414 = vmatpush1.msra.mxu0 %v354
    %415 = vmatprep.subr.mxu0 0.0
    %416 = vmatpush1.msra.mxu0 %v355
    %417 = vmatprep.subr.mxu0 0.0
    %418 = vmatpush1.msra.mxu0 %v356
    %419 = vmatprep.subr.mxu0 0.0
    %420 = vmatpush1.msra.mxu0 %v357
    %421 = vmatprep.subr.mxu0 0.0
    %422 = vmatpush1.msra.mxu0 %v358
    %423 = vmatprep.subr.mxu0 0.0
    %424 = vmatpush1.msra.mxu0 %v359
    %425 = vmatprep.subr.mxu0 0.0
    %426 = vmatpush1.msra.mxu0 %v360
    %427 = vmatprep.subr.mxu0 0.0
    %428 = vmatpush1.msra.mxu0 %v361
    %429 = vmatprep.subr.mxu0 0.0
    %430 = vmatpush1.msra.mxu0 %v362
    %431 = vmatprep.mubr.f32.mxu0 %v330
    %432 = vmatmul.mubr.f32.gmra.mrb[0].mxu0 %v329
    %v433 = vpop.f32.mrb[0].mxu0
    %v434 = vadd.f32 %v366, %v433
    %v435 = vpop.f32.mrb[0].mxu0
    %436 = vdwg.mxu0
    %437 = vst.msk [vmem:[#allocation5] sm:$0xff] %vm49, %v434
    // Predicated region
    $region26: #{tpu_custom_call.1} parent=1 // pred_check
      _
    $region27: #{tpu_custom_call.1} parent=1 // pred_check_branch
      %439 = sbr.rel (0) target = $region29
    $region28: #{tpu_custom_call.1} parent=1 // pred_region
      %s441 = ssub.s32 128, 128
      %442 = vsyncadd [#allocation4], %s441
      %s444 = sshll.u32 [#allocation5], 4
      %s445 = int_to_ptr.vmem [resolvable:$true] %s444
      %447 = dma.vmem_to_hbm [thread:$0]  %s445, 128, %s5, [#allocation4]
    $region29: #{tpu_custom_call.1} parent=1 // pred_fallthru
      _
    // Predicated region
    $region30: #{tpu_custom_call.1} parent=1 // pred_check
      _
    $region31: #{tpu_custom_call.1} parent=1 // pred_check_branch
      %449 = sbr.rel (0) target = $region33
    $region32: #{tpu_custom_call.1} parent=1 // pred_region
      %450 = dma.done [#allocation4], 128
    $region33: #{tpu_custom_call.1} parent=1 // pred_fallthru
      _
    %451 = vsyncpa [#allocation3], 1
    %452 = vsyncpa [#allocation4], 1

</llo_original>
